<compile_context>
chip_gen: v5e
topology: v5e:2x2
jax: 0.10.0
libtpu: 0.0.40
codegen_flags: <defaults>
</compile_context>

<pallas_src>
import functools

import jax
import jax.numpy as jnp
from jax.experimental import pallas as pl
from jax.experimental.pallas import tpu as pltpu


def _scores_kernel(featR_ref, feat0_ref, relaT_ref, acc_ref):
    """Phase 1: accumulate S^T over HW tiles; softmax in the finalize step.

    featR_ref : (D*C, THW)  feati^T tiles, stacked over i along rows
    feat0_ref : (C,   THW)  feat0 tile
    relaT_ref : (D*C, C)    output: rela_i^T stacked over i along rows
    acc_ref   : (D*C, C)    f32 VMEM accumulator
    """
    k = pl.program_id(0)

    @pl.when(k == 0)
    def _init():
        acc_ref[...] = jnp.zeros_like(acc_ref)

    # One batched matmul for all D score matrices:
    #   acc[i*C + a, b] += sum_hw feati[hw, a] * feat0[b, hw]  == (feat0 @ feati)^T
    acc_ref[...] += jax.lax.dot_general(
        featR_ref[...], feat0_ref[...],
        dimension_numbers=(((1,), (1,)), ((), ())),
        preferred_element_type=jnp.float32)

    @pl.when(k == pl.num_programs(0) - 1)
    def _finalize():
        # softmax(s_i, dim=0) == softmax(s_i^T, axis=1); rows are independent, so
        # one lane-axis softmax over the stacked (D*C, C) matrix is exact.
        s = acc_ref[...]
        s = s - jnp.max(s, axis=1, keepdims=True)
        p = jnp.exp(s)
        relaT_ref[...] = p / jnp.sum(p, axis=1, keepdims=True)


def _consistency_kernel(relaT_ref, featR_ref, res_ref, out_ref, *, d, c, t):
    """Phase 2: per HW tile, attention maps + pairwise consistency + residual.

    relaT_ref : (D*C, C)    resident rela_i^T matrices
    featR_ref : (D*C, THW)  feati^T tiles
    res_ref   : (C,   THW)  residual (feat0 raw-reshaped to (HW, C), transposed)
    out_ref   : (C,   THW)  channel-major output tile (lane-dense)
    """
    attns = []
    for i in range(d):                                   # d is static -> unrolled
        relaT_i = relaT_ref[i * c:(i + 1) * c, :]        # (C, C)   = rela_i^T
        f_i = featR_ref[i * c:(i + 1) * c, :]            # (C, THW) = feati^T tile
        # attn_i^T tile = rela_i^T @ feati^T
        attns.append(jnp.dot(relaT_i, f_i, preferred_element_type=jnp.float32))

    v = jnp.zeros_like(attns[0])
    for i in range(d):
        for j in range(i + 1, d):
            v = v + jnp.abs(attns[i] - attns[j])

    attn_sum = attns[0]
    for i in range(1, d):
        attn_sum = attn_sum + attns[i]

    # M = mean_i (v < t) * attn_i  ==  where(v < t, attn_sum * (1/D), 0)
    m = jnp.where(v < t, attn_sum * (1.0 / d), 0.0)
    out_ref[...] = m + res_ref[...]


def _pick_hw_tile(hw, dc, c):
    """Largest HW tile that is a multiple of 128, divides hw, and keeps the
    double-buffered phase-2 working set well inside v7x's 64 MiB VMEM."""
    if hw % 128 != 0:
        return hw                       # full-extent block is always legal
    budget = 12 << 20                   # bytes for the streamed tiles (per buffer set)
    max_lanes = max(128, budget // (4 * (dc + 2 * c)))
    for cand in (4096, 2048, 1024, 512, 256, 128):
        if cand <= max_lanes and hw % cand == 0:
            return cand
    return 128


def _vmem_limit(per_step_bytes):
    # double-buffered streamed tiles + resident buffers + headroom, clamped so it
    # is valid on every chip generation (v7x has only 64 MiB physical VMEM).
    return int(min(max(2 * per_step_bytes + (4 << 20), 16 << 20), 40 << 20))


def pair_consistency(feats, t):
    """feats: (B, C, H, W) float32.  Returns (C, H, W) float32."""
    b, c, h, w = feats.shape
    d = b - 1
    hw = h * w
    dc = d * c

    # --- JAX-side layout glue only (no compute) ---
    feat0 = jnp.transpose(feats[0], (2, 0, 1)).reshape(c, hw)                  # (C, HW)
    # feati^T for i = 1..B-1, stacked along rows -> (D*C, HW), channel-major.
    featR = jnp.transpose(feats[1:].reshape(d, hw, c), (0, 2, 1)).reshape(dc, hw)
    # Residual term in channel-major output coordinates:
    #   out^T = M^T + (feat0 raw-reshaped to (HW, C))^T
    res = feat0.reshape(hw, c).T                                               # (C, HW)

    thw = _pick_hw_tile(hw, dc, c)
    n_tiles = hw // thw
    itemsize = 4

    # ---- Phase 1: stacked score matrices + softmax -> relaT (D*C, C) ----
    p1_step_bytes = (dc + c) * thw * itemsize
    relaT = pl.pallas_call(
        _scores_kernel,
        out_shape=jax.ShapeDtypeStruct((dc, c), jnp.float32),
        grid_spec=pltpu.PrefetchScalarGridSpec(
            num_scalar_prefetch=0,
            grid=(n_tiles,),
            in_specs=[
                pl.BlockSpec((dc, thw), lambda k: (0, k)),
                pl.BlockSpec((c, thw), lambda k: (0, k)),
            ],
            out_specs=pl.BlockSpec((dc, c), lambda k: (0, 0)),
            scratch_shapes=[pltpu.VMEM((dc, c), jnp.float32)],
        ),
        compiler_params=pltpu.CompilerParams(
            dimension_semantics=("arbitrary",),            # HW is a reduction axis
            vmem_limit_bytes=_vmem_limit(p1_step_bytes),
        ),
    )(featR, feat0)

    # ---- Phase 2: attention maps + pairwise consistency + residual ----
    kernel2 = functools.partial(_consistency_kernel, d=d, c=c, t=float(t))
    p2_step_bytes = (dc + 2 * c) * thw * itemsize
    out_cm = pl.pallas_call(
        kernel2,
        out_shape=jax.ShapeDtypeStruct((c, hw), jnp.float32),
        grid_spec=pltpu.PrefetchScalarGridSpec(
            num_scalar_prefetch=0,
            grid=(n_tiles,),
            in_specs=[
                pl.BlockSpec((dc, c), lambda k: (0, 0)),   # resident relaT
                pl.BlockSpec((dc, thw), lambda k: (0, k)),
                pl.BlockSpec((c, thw), lambda k: (0, k)),
            ],
            out_specs=pl.BlockSpec((c, thw), lambda k: (0, k)),
        ),
        compiler_params=pltpu.CompilerParams(
            dimension_semantics=("parallel",),             # independent HW tiles
            vmem_limit_bytes=_vmem_limit(p2_step_bytes),
        ),
    )(relaT, featR, res)

    # out_cm is out^T (channel-major).  The torch result is the raw (HW, C) ->
    # (C, H, W) reinterpretation, so transpose back and raw-reshape (layout glue).
    return out_cm.T.reshape(c, h, w)


def pair_consistency_ref(feats, t):
    """Pure-JAX reference matching the (fixed) torch forward. Also returns v."""
    b, c, h, w = feats.shape
    feat0 = jnp.transpose(feats[0], (2, 0, 1)).reshape(c, h * w)
    attns = []
    for i in range(1, b):
        feati = feats[i].reshape(h * w, c)
        rela = jax.nn.softmax(feat0 @ feati, axis=0)
        attns.append((feati @ rela).reshape(c, h, w))
    D = len(attns)
    v = jnp.zeros((c, h, w), jnp.float32)
    for i in range(D):
        for j in range(i + 1, D):
            v = v + jnp.abs(attns[i] - attns[j])
    cmask = (v < t).astype(jnp.float32)
    M = jnp.zeros((c, h, w), jnp.float32)
    for i in range(D):
        M = M + cmask * attns[i]
    M = M / D
    return M + feat0.reshape(c, h, w), v


if __name__ == "__main__":
    key = jax.random.PRNGKey(0)
    B, C, H, W = 3, 8, 16, 16          # D = B-1 = 2 attention maps
    T = 0.5                            # module hyper-parameter `t`
    feats = jax.random.normal(key, (B, C, H, W), dtype=jnp.float32)

    out = jax.block_until_ready(pair_consistency(feats, T))
    ref, v_ref = pair_consistency_ref(feats, T)
    ref = jax.block_until_ready(ref)
    v_ref = jax.block_until_ready(v_ref)

    assert out.shape == (C, H, W)
    # Elements whose consistency value v sits essentially on the threshold t can
    # legitimately flip (v < t) under f32 reduction-order differences between the
    # MXU kernel and the XLA reference; exclude that measure-zero band from the
    # strict comparison and check everything else tightly.
    safe = jnp.abs(v_ref - T) > 1e-3
    assert float(jnp.mean(safe)) > 0.95
    assert jnp.allclose(jnp.where(safe, out, 0.0), jnp.where(safe, ref, 0.0),
                        atol=1e-3, rtol=1e-3)

    print("KERNEL_OK")
</pallas_src>

<mosaic_0001>
module attributes {stable_mosaic.version = 11 : i64} {
  func.func @_scores_kernel(%arg0: i32, %arg1: memref<16x256xf32, #tpu.memory_space<vmem>>, %arg2: memref<8x256xf32, #tpu.memory_space<vmem>>, %arg3: memref<16x8xf32, #tpu.memory_space<vmem>>, %arg4: memref<16x8xf32, #tpu.memory_space<vmem>>) attributes {dimension_semantics = [#tpu.dimension_semantics<arbitrary>], iteration_bounds = array<i64: 1>, scalar_prefetch = 0 : i64, scratch_operands = 1 : i64, tpu.core_type = #tpu.core_type<tc>, window_params = [{transform_indices = @transform_0, window_bounds = array<i64: 16, 256>}, {transform_indices = @transform_1, window_bounds = array<i64: 8, 256>}, {pipeline_mode = #tpu.pipeline_mode<synchronous>, transform_indices = @transform_2, window_bounds = array<i64: 16, 8>}]} {
    %c0_i32 = arith.constant 0 : i32
    %0 = arith.cmpi eq, %arg0, %c0_i32 : i32
    %1 = arith.extui %0 : i1 to i32
    %c0_i32_0 = arith.constant 0 : i32
    %2 = arith.cmpi ne, %1, %c0_i32_0 : i32
    scf.if %2 {
      %cst_10 = arith.constant 0.000000e+00 : f32
      %12 = vector.broadcast %cst_10 : f32 to vector<16x8xf32>
      %c0_11 = arith.constant 0 : index
      %c0_12 = arith.constant 0 : index
      %13 = vector.load %arg4[%c0_11, %c0_12] : memref<16x8xf32, #tpu.memory_space<vmem>>, vector<16x8xf32>
      tpu.vector_store %arg4[%c0_11, %c0_12], %12 {strides = array<i32>} : memref<16x8xf32, #tpu.memory_space<vmem>>, vector<16x8xf32>,
    } else {
    }
    %c0 = arith.constant 0 : index
    %c0_1 = arith.constant 0 : index
    %3 = vector.load %arg4[%c0, %c0_1] : memref<16x8xf32, #tpu.memory_space<vmem>>, vector<16x8xf32>
    %c0_2 = arith.constant 0 : index
    %c0_3 = arith.constant 0 : index
    %4 = vector.load %arg1[%c0_2, %c0_3] : memref<16x256xf32, #tpu.memory_space<vmem>>, vector<16x256xf32>
    %c0_4 = arith.constant 0 : index
    %c0_5 = arith.constant 0 : index
    %5 = vector.load %arg2[%c0_4, %c0_5] : memref<8x256xf32, #tpu.memory_space<vmem>>, vector<8x256xf32>
    %cst = arith.constant dense<0.000000e+00> : vector<16x8xf32>
    %6 = tpu.matmul %4, %5, %cst {dimension_numbers = #tpu.dot_dimension_numbers<[1], [1], [0], [0], [0, 0, 1, 0], [], []>} : vector<16x256xf32>, vector<8x256xf32>, vector<16x8xf32> -> vector<16x8xf32>
    %7 = arith.addf %3, %6 : vector<16x8xf32>
    %c0_6 = arith.constant 0 : index
    %c0_7 = arith.constant 0 : index
    %8 = vector.load %arg4[%c0_6, %c0_7] : memref<16x8xf32, #tpu.memory_space<vmem>>, vector<16x8xf32>
    tpu.vector_store %arg4[%c0_6, %c0_7], %7 {strides = array<i32>} : memref<16x8xf32, #tpu.memory_space<vmem>>, vector<16x8xf32>,
    %c0_i32_8 = arith.constant 0 : i32
    %9 = arith.cmpi eq, %arg0, %c0_i32_8 : i32
    %10 = arith.extui %9 : i1 to i32
    %c0_i32_9 = arith.constant 0 : i32
    %11 = arith.cmpi ne, %10, %c0_i32_9 : i32
    scf.if %11 {
      %c0_10 = arith.constant 0 : index
      %c0_11 = arith.constant 0 : index
      %12 = vector.load %arg4[%c0_10, %c0_11] : memref<16x8xf32, #tpu.memory_space<vmem>>, vector<16x8xf32>
      %cst_12 = arith.constant dense<0xFF800000> : vector<16xf32>
      %13 = vector.multi_reduction <maximumf>, %12, %cst_12 [1] : vector<16x8xf32> to vector<16xf32>
      %14 = vector.shape_cast %13 : vector<16xf32> to vector<16x1xf32>
      %15 = vector.broadcast %14 : vector<16x1xf32> to vector<16x8xf32>
      %16 = arith.subf %12, %15 : vector<16x8xf32>
      %17 = math.exp %16 : vector<16x8xf32>
      %cst_13 = arith.constant dense<0.000000e+00> : vector<16xf32>
      %18 = vector.multi_reduction <add>, %17, %cst_13 [1] : vector<16x8xf32> to vector<16xf32>
      %19 = vector.shape_cast %18 : vector<16xf32> to vector<16x1xf32>
      %20 = vector.broadcast %19 : vector<16x1xf32> to vector<16x8xf32>
      %21 = arith.divf %17, %20 : vector<16x8xf32>
      %c0_14 = arith.constant 0 : index
      %c0_15 = arith.constant 0 : index
      %22 = vector.load %arg3[%c0_14, %c0_15] : memref<16x8xf32, #tpu.memory_space<vmem>>, vector<16x8xf32>
      tpu.vector_store %arg3[%c0_14, %c0_15], %21 {strides = array<i32>} : memref<16x8xf32, #tpu.memory_space<vmem>>, vector<16x8xf32>,
    } else {
    }
    return
  }
  func.func @transform_0(%arg0: i32) -> (i32, i32) {
    %c0_i32 = arith.constant 0 : i32
    %c0_i32_0 = arith.constant 0 : i32
    return %c0_i32, %arg0 : i32, i32
  }
  func.func @transform_1(%arg0: i32) -> (i32, i32) {
    %c0_i32 = arith.constant 0 : i32
    %c0_i32_0 = arith.constant 0 : i32
    return %c0_i32, %arg0 : i32, i32
  }
  func.func @transform_2(%arg0: i32) -> (i32, i32) {
    %c0_i32 = arith.constant 0 : i32
    %c0_i32_0 = arith.constant 0 : i32
    %c0_i32_1 = arith.constant 0 : i32
    return %c0_i32, %c0_i32_0 : i32, i32
  }
}

</mosaic_0001>

<llo_original>
// kernel: tpu_custom_call.1
$region0: #{tpu_custom_call.1}
  #allocation0 [shape = 'u32[]', space=smem, size = 0x4, offset = 0x4, fixed_abs, tag = 'smem constant byte address 0x4 - core index']
  #allocation1 [shape = 'u32[72,128]{1,0:T(1,128)}', space=vmem, size = 0x9000, scoped, tag = 'internal scratch']
  #allocation2 [shape = 'f32[16,8]{1,0:T(8,128)}', space=vmem, size = 0x2000, scoped, tag = 'scratch operand']
  %s0 = inlined_call_operand.hbm [shape: f32[16,256], index: 0, kind: input, shape index: {}]
  %s1 = inlined_call_operand.hbm [shape: f32[8,256], index: 1, kind: input, shape index: {}]
  %s2 = inlined_call_operand.vmem [shape: f32[16,8], index: 2, kind: output, shape index: {}]
  %s3 = sld [smem:[#allocation0]]
  $region34: #{tpu_custom_call.1} parent=0
    _
  %s5 = ssub.s32 1, %s3
  %s6 = scalar_select 0, %s5, %s3
  $region1: #{tpu_custom_call.1} parent=0
    #allocation3 [shape = 'u8[16384]{0}', space=vmem, size = 0x4000, scoped, tag = 'input window, operand 0, single buffered']
    #allocation4 [shape = 's32[1]{0}', space=sflag, size = 0x4, scoped, tag = 'scoped memory for tpu_custom_call.1']
    #allocation5 [shape = 'u8[8192]{0}', space=vmem, size = 0x2000, scoped, tag = 'input window, operand 1, single buffered']
    #allocation6 [shape = 's32[1]{0}', space=sflag, size = 0x4, scoped, tag = 'scoped memory for tpu_custom_call.1']
    %7 = vsyncpa [#allocation4], 0
    %8 = vsyncpa [#allocation6], 0
    // Predicated region
    $region2: #{tpu_custom_call.1} parent=1 // pred_check
      _
    $region3: #{tpu_custom_call.1} parent=1 // pred_check_branch
      %10 = sbr.rel (0) target = $region5
    $region4: #{tpu_custom_call.1} parent=1 // pred_region
      %12 = vsyncadd [#allocation4], 0
      %s13 = sshll.u32 %s0, 4
      %s14 = int_to_ptr.hbm [resolvable:$true] %s13
      %s15 = sshll.u32 [#allocation3], 4
      %s16 = int_to_ptr.vmem [resolvable:$true] %s15
      %21 = dma.hbm_to_vmem [thread:$0]  %s14, 512, %s16, [#allocation4], 256, 256, 16
    $region5: #{tpu_custom_call.1} parent=1 // pred_fallthru
      _
    // Predicated region
    $region6: #{tpu_custom_call.1} parent=1 // pred_check
      _
    $region7: #{tpu_custom_call.1} parent=1 // pred_check_branch
      %23 = sbr.rel (0) target = $region9
    $region8: #{tpu_custom_call.1} parent=1 // pred_region
      %25 = vsyncadd [#allocation6], 0
      %s27 = sshll.u32 %s1, 4
      %s28 = int_to_ptr.hbm [resolvable:$true] %s27
      %s29 = sshll.u32 [#allocation5], 4
      %s30 = int_to_ptr.vmem [resolvable:$true] %s29
      %32 = dma.hbm_to_vmem [thread:$0]  %s28, 256, %s30, [#allocation6]
    $region9: #{tpu_custom_call.1} parent=1 // pred_fallthru
      _
    // Predicated region
    $region10: #{tpu_custom_call.1} parent=1 // pred_check
      _
    $region11: #{tpu_custom_call.1} parent=1 // pred_check_branch
      %34 = sbr.rel (0) target = $region13
    $region12: #{tpu_custom_call.1} parent=1 // pred_region
      %36 = dma.done [#allocation4], 512
    $region13: #{tpu_custom_call.1} parent=1 // pred_fallthru
      _
    // Predicated region
    $region14: #{tpu_custom_call.1} parent=1 // pred_check
      _
    $region15: #{tpu_custom_call.1} parent=1 // pred_check_branch
      %38 = sbr.rel (0) target = $region17
    $region16: #{tpu_custom_call.1} parent=1 // pred_region
      %40 = dma.done [#allocation6], 256
    $region17: #{tpu_custom_call.1} parent=1 // pred_fallthru
      _
    %p41 = scmp.eq.s32.totalorder 0, 0
    // Predicated region
    $region18: #{tpu_custom_call.1} parent=1 // pred_check
      %p42 = pneg %p41
    $region19: #{tpu_custom_call.1} parent=1 // pred_check_branch
      %44 = sbr.rel (%p42) target = $region21
    $region20: #{tpu_custom_call.1} parent=1 // pred_region
      %vm45 = vcmask 64512
      %46 = vst.msk [vmem:[#allocation2] sm:$0xff] %vm45, 0.0
      %47 = vst.msk [vmem:[#allocation2 + $0x8] sm:$0xff] %vm45, 0.0
    $region21: #{tpu_custom_call.1} parent=1 // pred_fallthru
      _
    %v48 = vld [vmem:[#allocation2] sm:$0xff]
    %v49 = vld [vmem:[#allocation2 + $0x8] sm:$0xff]
    %v50 = vld [vmem:[#allocation3] sm:$0xff]
    %v51 = vld [vmem:[#allocation3 + $0x8] sm:$0xff]
    %v52 = vld [vmem:[#allocation3 + $0x10] sm:$0xff]
    %v53 = vld [vmem:[#allocation3 + $0x18] sm:$0xff]
    %v54 = vld [vmem:[#allocation5] sm:$0xff]
    %v55 = vld [vmem:[#allocation5 + $0x8] sm:$0xff]
    %56 = vmatpush.xpose.msra.mxu0 0.0
    %57 = vmatpush.xpose.msra.mxu0 0.0
    %58 = vmatpush.xpose.msra.mxu0 0.0
    %59 = vmatpush.xpose.msra.mxu0 0.0
    %60 = vmatpush.xpose.msra.mxu0 0.0
    %61 = vmatpush.xpose.msra.mxu0 0.0
    %62 = vmatpush.xpose.msra.mxu0 0.0
    %63 = vmatpush.xpose.msra.mxu0 0.0
    %64 = vmatpush.xpose.msra.mxu0 0.0
    %65 = vmatpush.xpose.msra.mxu0 0.0
    %66 = vmatpush.xpose.msra.mxu0 0.0
    %67 = vmatpush.xpose.msra.mxu0 0.0
    %68 = vmatpush.xpose.msra.mxu0 0.0
    %69 = vmatpush.xpose.msra.mxu0 0.0
    %70 = vmatpush.xpose.msra.mxu0 0.0
    %71 = vmatpush.xpose.msra.mxu0 %v54
    %72 = vmatmul.f32.gmra.mxu0 %v50
    %v73 = vpop.f32.mrf.mxu0
    %v74 = vadd.f32 0.0, %v73
    %75 = vmatmul.f32.gmra.mxu0 %v52
    %v76 = vpop.f32.mrf.mxu0
    %v77 = vadd.f32 0.0, %v76
    %78 = vdwg.mxu0
    %79 = vmatpush.xpose.msra.mxu0 0.0
    %80 = vmatpush.xpose.msra.mxu0 0.0
    %81 = vmatpush.xpose.msra.mxu0 0.0
    %82 = vmatpush.xpose.msra.mxu0 0.0
    %83 = vmatpush.xpose.msra.mxu0 0.0
    %84 = vmatpush.xpose.msra.mxu0 0.0
    %85 = vmatpush.xpose.msra.mxu0 0.0
    %86 = vmatpush.xpose.msra.mxu0 0.0
    %87 = vmatpush.xpose.msra.mxu0 0.0
    %88 = vmatpush.xpose.msra.mxu0 0.0
    %89 = vmatpush.xpose.msra.mxu0 0.0
    %90 = vmatpush.xpose.msra.mxu0 0.0
    %91 = vmatpush.xpose.msra.mxu0 0.0
    %92 = vmatpush.xpose.msra.mxu0 0.0
    %93 = vmatpush.xpose.msra.mxu0 0.0
    %94 = vmatpush.xpose.msra.mxu0 %v55
    %95 = vmatmul.f32.gmra.mxu0 %v51
    %v96 = vpop.f32.mrf.mxu0
    %v97 = vadd.f32 %v74, %v96
    %98 = vmatmul.f32.gmra.mxu0 %v53
    %v99 = vpop.f32.mrf.mxu0
    %v100 = vadd.f32 %v77, %v99
    %101 = vdwg.mxu0
    %v102 = vadd.f32 %v48, %v97
    %v103 = vadd.f32 %v49, %v100
    %vm104 = vcmask 64512
    %105 = vst.msk [vmem:[#allocation2] sm:$0xff] %vm104, %v102
    %106 = vst.msk [vmem:[#allocation2 + $0x8] sm:$0xff] %vm104, %v103
    // Predicated region
    $region22: #{tpu_custom_call.1} parent=1 // pred_check
      %p107 = pneg %p41
    $region23: #{tpu_custom_call.1} parent=1 // pred_check_branch
      %109 = sbr.rel (%p107) target = $region25
    $region24: #{tpu_custom_call.1} parent=1 // pred_region
      %v110 = vld [vmem:[#allocation2] sm:$0xff]
      %v111 = vld [vmem:[#allocation2 + $0x8] sm:$0xff]
      %v112 = vsel %vm104, %v110, -inf
      %113 = vmax.xlane.f32.xlu0 %v112
      %v114 = vpop.xlane.xlu0 %113
      %v115 = vsel %vm104, %v111, -inf
      %116 = vmax.xlane.f32.xlu0 %v115
      %v117 = vpop.xlane.xlu0 %116
      %v118 = vsub.f32 %v110, %v114
      %v119 = vsub.f32 %v111, %v117
      %v120 = vmul.f32 %v118, 1.442695
      %v121 = vpow.pop %v120
      %v122 = vmul.f32 %v119, 1.442695
      %v123 = vpow.pop %v122
      %v124 = vsel %vm104, %v121, 0.0
      %125 = vadd.xlane.f32.xlu0 %v124
      %v126 = vpop.xlane.xlu0 %125
      %v127 = vsel %vm104, %v123, 0.0
      %128 = vadd.xlane.f32.xlu0 %v127
      %v129 = vpop.xlane.xlu0 %128
      %v130 = vrcp.pop %v126
      %v131 = vmul.f32 %v126, %v130
      %v132 = vsub.f32 1.0, %v131
      %v133 = vmul.f32 %v130, %v132
      %v134 = vadd.f32 %v130, %v133
      %vm135 = vweird.f32 %v126
      %vm136 = vweird.f32 %v130
      %vm137 = vmor %vm135, %vm136
      %v138 = vsel %vm137, %v130, %v134
      %v139 = vand.u32 2147483647, %v126
      %vm140 = vcmp.eq.f32.partialorder %v139, 8.507059e+37
      %v141 = vand.u32 %v126, 2147483648
      %v142 = vor.u32 1.1754944e-38, %v141
      %v143 = vsel %vm140, %v142, %v138
      %v144 = vmul.f32 %v121, %v143
      %v145 = vrcp.pop %v129
      %v146 = vmul.f32 %v129, %v145
      %v147 = vsub.f32 1.0, %v146
      %v148 = vmul.f32 %v145, %v147
      %v149 = vadd.f32 %v145, %v148
      %vm150 = vweird.f32 %v129
      %vm151 = vweird.f32 %v145
      %vm152 = vmor %vm150, %vm151
      %v153 = vsel %vm152, %v145, %v149
      %v154 = vand.u32 2147483647, %v129
      %vm155 = vcmp.eq.f32.partialorder %v154, 8.507059e+37
      %v156 = vand.u32 %v129, 2147483648
      %v157 = vor.u32 1.1754944e-38, %v156
      %v158 = vsel %vm155, %v157, %v153
      %v159 = vmul.f32 %v123, %v158
      %160 = vst.msk [vmem:[%s2] sm:$0xff] %vm104, %v144
      %161 = vst.msk [vmem:[%s2 + $0x8] sm:$0xff] %vm104, %v159
    $region25: #{tpu_custom_call.1} parent=1 // pred_fallthru
      _
    // Predicated region
    $region26: #{tpu_custom_call.1} parent=1 // pred_check
      _
    $region27: #{tpu_custom_call.1} parent=1 // pred_check_branch
      %163 = sbr.rel (0) target = $region29
    $region28: #{tpu_custom_call.1} parent=1 // pred_region
      _
    $region29: #{tpu_custom_call.1} parent=1 // pred_fallthru
      _
    // Predicated region
    $region30: #{tpu_custom_call.1} parent=1 // pred_check
      _
    $region31: #{tpu_custom_call.1} parent=1 // pred_check_branch
      %165 = sbr.rel (0) target = $region33
    $region32: #{tpu_custom_call.1} parent=1 // pred_region
      _
    $region33: #{tpu_custom_call.1} parent=1 // pred_fallthru
      _
    %166 = vsyncpa [#allocation4], 1
    %167 = vsyncpa [#allocation6], 1

</llo_original>
